<compile_context>
chip_gen: v5e
topology: v5e:2x2
jax: 0.10.0
libtpu: 0.0.40
codegen_flags: <defaults>
</compile_context>

<pallas_src>
import functools

import jax
import jax.numpy as jnp
from jax import lax
from jax.experimental import pallas as pl
from jax.experimental.pallas import tpu as pltpu

_LANES = 128   # lane width; hidden dim H (< 128) lives in lanes
_ROWS = 8      # steps per unrolled chunk == sublane tile
_REP = 4       # [x0; x1] row pattern replicated 4x -> one full 8-sublane vreg


def _forward_euler_kernel(nchunks_ref, x0_ref, uproj_ref, w1x_ref, w2s_ref,
                          out_ref, state_scr, *, steps_per_block):
    chunks_per_tile = steps_per_block // _ROWS

    # state_scr persists across grid (time-tile) iterations; rows alternate [x0, x1] x4,
    # each state component broadcast across all 128 lanes.
    @pl.when(pl.program_id(0) == 0)
    def _():
        state_scr[...] = x0_ref[...]

    # Parameters loaded once per time tile (live in vregs).
    w1x8 = w1x_ref[...]   # rows alternate [W1x[0,:], W1x[1,:]] x4, lane H == 0
    w2s8 = w2s_ref[...]   # rows alternate [W2[:,0]*dt, W2[:,1]*dt] x4, lane H == b2*dt

    x_pk = state_scr[...]  # (8,128) packed state

    def chunk_body(c, x_pk):
        base = pl.multiple_of(c * _ROWS, _ROWS)
        obase = pl.multiple_of(c * (2 * _ROWS), 2 * _ROWS)
        snaps = []
        for r in range(_ROWS):                                   # fully unrolled
            u_q = uproj_ref[pl.ds(base + r, 1), :]               # (1,128) direct vld
            # layer 1: one VPU mul + one native sublane roll + VPU adds.  Because the rows
            # alternate [p0,p1,p0,...], prod + roll(prod,1) puts p0+p1 in EVERY row.
            prod = x_pk * w1x8
            pre = prod + pltpu.roll(prod, shift=1, axis=0)
            h = jnp.tanh(pre + u_q)                              # EUP; u bcast is off-chain
            # layer 2 (dt and b2*dt folded in): one lane reduce + one lane broadcast.
            d = jnp.sum(h * w2s8, axis=-1, keepdims=True)        # (8,1) = [d0,d1,d0,...]
            x_pk = x_pk + jnp.broadcast_to(d, (_ROWS, _LANES))
            snaps.append(x_pk[0:2, :])                           # [x0; x1] snapshot (off-chain)
        # one unmasked lane-dense (16,128) store per 8 steps
        out_ref[pl.ds(obase, 2 * _ROWS), :] = jnp.concatenate(snaps, axis=0)
        return x_pk

    # Skip padded tail chunks: only run the chunks that contain valid time steps.
    done = pl.program_id(0) * chunks_per_tile
    n_valid = jnp.maximum(jnp.minimum(nchunks_ref[0] - done, chunks_per_tile), 0)
    x_pk = lax.fori_loop(0, n_valid, chunk_body, x_pk)

    # carry the state to the next time tile
    state_scr[...] = x_pk


def forward_euler_pem(x0, u, w1x, w1u, b1, w2, b2, dt, *, max_tile_steps=2048):
    """Pallas implementation of ForwardEulerPEM.forward with update == 0.

    x0: (1, 2) f32, u: (N, n_u) f32.  Returns xhat_data: (N, 2) f32.
    """
    N, n_u = u.shape
    n_x = x0.shape[1]
    H = w1x.shape[1]
    assert n_x == 2 and w1x.shape[0] == 2 and w2.shape == (H, 2), "module is a 2-state model"
    assert H < _LANES, "one free lane is needed to fold b2*dt via a saturated tanh unit"

    f32 = jnp.float32
    dt = float(dt)

    n_chunks = -(-N // _ROWS)                       # ceil(N/8): valid 8-step chunks
    T = max(min(max_tile_steps, n_chunks * _ROWS), _ROWS)   # steps per tile (multiple of 8)
    n_tiles = -(-N // T)
    N_pad = n_tiles * T

    # Input projection hoisted out of the serial recurrence, built directly lane-dense at
    # (N_pad, 128).  Lane H is a saturated unit (tanh(30.0) == 1.0 in f32) that injects
    # b2*dt through the layer-2 weights, removing the per-step bias adds.
    w1u_p = jnp.zeros((n_u, _LANES), f32).at[:, :H].set(w1u.astype(f32))
    b1_p = jnp.zeros((_LANES,), f32).at[:H].set(b1.astype(f32)).at[H].set(30.0)
    u_p = jnp.zeros((N_pad, n_u), f32).at[:N].set(u.astype(f32))
    uproj = u_p @ w1u_p + b1_p[None, :]                              # (N_pad, 128)

    # Packed (8,128) parameter/state tiles; dt folded into layer-2 weights.
    row_w1x = jnp.zeros((2, _LANES), f32).at[:, :H].set(w1x.astype(f32))
    row_w2s = (jnp.zeros((2, _LANES), f32)
               .at[:, :H].set(w2.astype(f32).T * dt)
               .at[:, H].set(b2.astype(f32) * dt))
    row_x0 = jnp.broadcast_to(x0.astype(f32).reshape(2, 1), (2, _LANES))
    w1x8 = jnp.tile(row_w1x, (_REP, 1))
    w2s8 = jnp.tile(row_w2s, (_REP, 1))
    x0_8 = jnp.tile(row_x0, (_REP, 1))

    nchunks_arr = jnp.array([n_chunks], jnp.int32)

    kernel = functools.partial(_forward_euler_kernel, steps_per_block=T)

    out_padded = pl.pallas_call(
        kernel,
        out_shape=jax.ShapeDtypeStruct((2 * N_pad, _LANES), f32),
        grid_spec=pltpu.PrefetchScalarGridSpec(
            num_scalar_prefetch=1,
            grid=(n_tiles,),
            in_specs=[
                pl.BlockSpec((_ROWS, _LANES), lambda i, n: (0, 0)),   # packed x0
                pl.BlockSpec((T, _LANES), lambda i, n: (i, 0)),       # u_proj time tile
                pl.BlockSpec((_ROWS, _LANES), lambda i, n: (0, 0)),   # packed W1x
                pl.BlockSpec((_ROWS, _LANES), lambda i, n: (0, 0)),   # packed W2*dt (+b2*dt)
            ],
            out_specs=pl.BlockSpec((2 * T, _LANES), lambda i, n: (i, 0)),
            scratch_shapes=[pltpu.VMEM((_ROWS, _LANES), f32)],        # state across tiles
        ),
        compiler_params=pltpu.CompilerParams(
            dimension_semantics=("arbitrary",),
            vmem_limit_bytes=32 * 1024 * 1024,
        ),
    )(nchunks_arr, x0_8, uproj, w1x8, w2s8)

    # rows [2q, 2q+1] hold step q's [x0, x1] broadcast over lanes -> take lane 0
    return out_padded.reshape(N_pad, 2, _LANES)[:N, :, 0]


def reference(x0, u, w1x, w1u, b1, w2, b2, dt):
    """Pure-JAX reference of the same forward-Euler rollout."""

    def step(x, u_q):
        h = jnp.tanh(x @ w1x + u_q[None, :] @ w1u + b1[None, :])
        dx = h @ w2 + b2[None, :]
        x_new = x + dx * dt
        return x_new, x_new[0]

    _, ys = lax.scan(step, x0, u)
    return ys  # (N, n_x)


if __name__ == "__main__":
    key = jax.random.PRNGKey(0)

    def make_problem(k, N, n_x, n_u, H, w_scale):
        ks = jax.random.split(k, 7)
        x0 = jax.random.normal(ks[0], (1, n_x), jnp.float32)
        u = jax.random.normal(ks[1], (N, n_u), jnp.float32)
        w1x = w_scale * jax.random.normal(ks[2], (n_x, H), jnp.float32)
        w1u = w_scale * jax.random.normal(ks[3], (n_u, H), jnp.float32)
        b1 = 0.1 * jax.random.normal(ks[4], (H,), jnp.float32)
        w2 = w_scale * jax.random.normal(ks[5], (H, n_x), jnp.float32)
        b2 = 0.1 * jax.random.normal(ks[6], (n_x,), jnp.float32)
        return x0, u, w1x, w1u, b1, w2, b2

    k1, k2 = jax.random.split(key)

    # Test 1: single time tile, N=64 (no padded steps).
    args1 = make_problem(k1, 64, 2, 1, 32, 0.5)
    out1 = jax.block_until_ready(forward_euler_pem(*args1, dt=0.05))
    ref1 = jax.block_until_ready(reference(*args1, dt=0.05))
    assert out1.shape == (64, 2), out1.shape
    err1 = float(jnp.max(jnp.abs(out1 - ref1)))
    assert err1 < 2e-3, f"N=64 mismatch vs reference: max_err={err1}"

    # Test 2: long rollout N=601 with max_tile_steps=256 -> padded to 768, grid=(3,);
    # exercises cross-tile state carry, padded-tail-chunk skipping and the N % 8 path.
    args2 = make_problem(k2, 601, 2, 1, 32, 0.1)
    out2 = jax.block_until_ready(forward_euler_pem(*args2, dt=0.05, max_tile_steps=256))
    ref2 = jax.block_until_ready(reference(*args2, dt=0.05))
    assert out2.shape == (601, 2), out2.shape
    err2 = float(jnp.max(jnp.abs(out2 - ref2) / (1.0 + jnp.abs(ref2))))
    assert err2 < 1e-2, f"N=601 mismatch vs reference: rel_err={err2}"

    print("KERNEL_OK")
</pallas_src>

<mosaic_0001>
module attributes {stable_mosaic.version = 11 : i64} {
  func.func @_forward_euler_kernel(%arg0: i32, %arg1: memref<1xi32, #tpu.memory_space<smem>>, %arg2: memref<8x128xf32, #tpu.memory_space<vmem>>, %arg3: memref<64x128xf32, #tpu.memory_space<vmem>>, %arg4: memref<8x128xf32, #tpu.memory_space<vmem>>, %arg5: memref<8x128xf32, #tpu.memory_space<vmem>>, %arg6: memref<128x128xf32, #tpu.memory_space<vmem>>, %arg7: memref<8x128xf32, #tpu.memory_space<vmem>>) attributes {dimension_semantics = [#tpu.dimension_semantics<arbitrary>], iteration_bounds = array<i64: 1>, scalar_prefetch = 1 : i64, scratch_operands = 1 : i64, tpu.core_type = #tpu.core_type<tc>, window_params = [{pipeline_mode = #tpu.pipeline_mode<synchronous>, transform_indices = @transform_0, window_bounds = array<i64: 8, 128>}, {transform_indices = @transform_1, window_bounds = array<i64: 64, 128>}, {pipeline_mode = #tpu.pipeline_mode<synchronous>, transform_indices = @transform_2, window_bounds = array<i64: 8, 128>}, {pipeline_mode = #tpu.pipeline_mode<synchronous>, transform_indices = @transform_3, window_bounds = array<i64: 8, 128>}, {transform_indices = @transform_4, window_bounds = array<i64: 128, 128>}]} {
    %c0_i32 = arith.constant 0 : i32
    %0 = arith.cmpi eq, %arg0, %c0_i32 : i32
    %1 = arith.extui %0 : i1 to i32
    %c0_i32_0 = arith.constant 0 : i32
    %2 = arith.cmpi ne, %1, %c0_i32_0 : i32
    scf.if %2 {
      %c0_12 = arith.constant 0 : index
      %c0_13 = arith.constant 0 : index
      %15 = vector.load %arg2[%c0_12, %c0_13] : memref<8x128xf32, #tpu.memory_space<vmem>>, vector<8x128xf32>
      %c0_14 = arith.constant 0 : index
      %c0_15 = arith.constant 0 : index
      %16 = vector.load %arg7[%c0_14, %c0_15] : memref<8x128xf32, #tpu.memory_space<vmem>>, vector<8x128xf32>
      tpu.vector_store %arg7[%c0_14, %c0_15], %15 {strides = array<i32>} : memref<8x128xf32, #tpu.memory_space<vmem>>, vector<8x128xf32>,
    } else {
    }
    %c0 = arith.constant 0 : index
    %c0_1 = arith.constant 0 : index
    %3 = vector.load %arg4[%c0, %c0_1] : memref<8x128xf32, #tpu.memory_space<vmem>>, vector<8x128xf32>
    %c0_2 = arith.constant 0 : index
    %c0_3 = arith.constant 0 : index
    %4 = vector.load %arg5[%c0_2, %c0_3] : memref<8x128xf32, #tpu.memory_space<vmem>>, vector<8x128xf32>
    %c0_4 = arith.constant 0 : index
    %c0_5 = arith.constant 0 : index
    %5 = vector.load %arg7[%c0_4, %c0_5] : memref<8x128xf32, #tpu.memory_space<vmem>>, vector<8x128xf32>
    %c8_i32 = arith.constant 8 : i32
    %6 = arith.muli %arg0, %c8_i32 : i32
    %c0_6 = arith.constant 0 : index
    %7 = memref.load %arg1[%c0_6] : memref<1xi32, #tpu.memory_space<smem>>
    %8 = arith.subi %7, %6 : i32
    %c8_i32_7 = arith.constant 8 : i32
    %9 = arith.minsi %8, %c8_i32_7 : i32
    %c0_i32_8 = arith.constant 0 : i32
    %10 = arith.maxsi %9, %c0_i32_8 : i32
    %c0_i32_9 = arith.constant 0 : i32
    %11 = arith.subi %10, %c0_i32_9 : i32
    %12 = arith.addi %c0_i32_9, %11 : i32
    %c1_i32 = arith.constant 1 : i32
    %13 = scf.for %arg8 = %c0_i32_9 to %12 step %c1_i32 iter_args(%arg9 = %5) -> (vector<8x128xf32>)  : i32 {
      %c8_i32_12 = arith.constant 8 : i32
      %15 = arith.muli %arg8, %c8_i32_12 : i32
      %16 = tpu.assume_multiple %15, 8 : i32
      %c16_i32 = arith.constant 16 : i32
      %17 = arith.muli %arg8, %c16_i32 : i32
      %18 = tpu.assume_multiple %17, 16 : i32
      %c0_i32_13 = arith.constant 0 : i32
      %19 = arith.addi %16, %c0_i32_13 : i32
      %20 = arith.index_cast %19 : i32 to index
      %c0_14 = arith.constant 0 : index
      %21 = vector.load %arg3[%20, %c0_14] : memref<64x128xf32, #tpu.memory_space<vmem>>, vector<1x128xf32>
      %22 = arith.mulf %arg9, %3 : vector<8x128xf32>
      %c1_i32_15 = arith.constant 1 : i32
      %23 = tpu.dynamic_rotate %22 by %c1_i32_15 dim 0 : vector<8x128xf32>, i32 -> vector<8x128xf32>
      %24 = arith.addf %22, %23 : vector<8x128xf32>
      %25 = vector.broadcast %21 : vector<1x128xf32> to vector<8x128xf32>
      %26 = arith.addf %24, %25 : vector<8x128xf32>
      %27 = math.tanh %26 : vector<8x128xf32>
      %28 = arith.mulf %27, %4 : vector<8x128xf32>
      %cst = arith.constant dense<0.000000e+00> : vector<8xf32>
      %29 = vector.multi_reduction <add>, %28, %cst [1] : vector<8x128xf32> to vector<8xf32>
      %30 = vector.shape_cast %29 : vector<8xf32> to vector<8x1xf32>
      %31 = vector.shape_cast %30 : vector<8x1xf32> to vector<8x1xf32>
      %32 = vector.broadcast %31 : vector<8x1xf32> to vector<8x128xf32>
      %33 = arith.addf %arg9, %32 : vector<8x128xf32>
      %34 = vector.extract_strided_slice %33 {offsets = [0, 0], sizes = [2, 128], strides = [1, 1]} : vector<8x128xf32> to vector<2x128xf32>
      %c1_i32_16 = arith.constant 1 : i32
      %35 = arith.addi %16, %c1_i32_16 : i32
      %36 = arith.index_cast %35 : i32 to index
      %c0_17 = arith.constant 0 : index
      %37 = vector.load %arg3[%36, %c0_17] : memref<64x128xf32, #tpu.memory_space<vmem>>, vector<1x128xf32>
      %38 = arith.mulf %33, %3 : vector<8x128xf32>
      %c1_i32_18 = arith.constant 1 : i32
      %39 = tpu.dynamic_rotate %38 by %c1_i32_18 dim 0 : vector<8x128xf32>, i32 -> vector<8x128xf32>
      %40 = arith.addf %38, %39 : vector<8x128xf32>
      %41 = vector.broadcast %37 : vector<1x128xf32> to vector<8x128xf32>
      %42 = arith.addf %40, %41 : vector<8x128xf32>
      %43 = math.tanh %42 : vector<8x128xf32>
      %44 = arith.mulf %43, %4 : vector<8x128xf32>
      %cst_19 = arith.constant dense<0.000000e+00> : vector<8xf32>
      %45 = vector.multi_reduction <add>, %44, %cst_19 [1] : vector<8x128xf32> to vector<8xf32>
      %46 = vector.shape_cast %45 : vector<8xf32> to vector<8x1xf32>
      %47 = vector.shape_cast %46 : vector<8x1xf32> to vector<8x1xf32>
      %48 = vector.broadcast %47 : vector<8x1xf32> to vector<8x128xf32>
      %49 = arith.addf %33, %48 : vector<8x128xf32>
      %50 = vector.extract_strided_slice %49 {offsets = [0, 0], sizes = [2, 128], strides = [1, 1]} : vector<8x128xf32> to vector<2x128xf32>
      %c2_i32 = arith.constant 2 : i32
      %51 = arith.addi %16, %c2_i32 : i32
      %52 = arith.index_cast %51 : i32 to index
      %c0_20 = arith.constant 0 : index
      %53 = vector.load %arg3[%52, %c0_20] : memref<64x128xf32, #tpu.memory_space<vmem>>, vector<1x128xf32>
      %54 = arith.mulf %49, %3 : vector<8x128xf32>
      %c1_i32_21 = arith.constant 1 : i32
      %55 = tpu.dynamic_rotate %54 by %c1_i32_21 dim 0 : vector<8x128xf32>, i32 -> vector<8x128xf32>
      %56 = arith.addf %54, %55 : vector<8x128xf32>
      %57 = vector.broadcast %53 : vector<1x128xf32> to vector<8x128xf32>
      %58 = arith.addf %56, %57 : vector<8x128xf32>
      %59 = math.tanh %58 : vector<8x128xf32>
      %60 = arith.mulf %59, %4 : vector<8x128xf32>
      %cst_22 = arith.constant dense<0.000000e+00> : vector<8xf32>
      %61 = vector.multi_reduction <add>, %60, %cst_22 [1] : vector<8x128xf32> to vector<8xf32>
      %62 = vector.shape_cast %61 : vector<8xf32> to vector<8x1xf32>
      %63 = vector.shape_cast %62 : vector<8x1xf32> to vector<8x1xf32>
      %64 = vector.broadcast %63 : vector<8x1xf32> to vector<8x128xf32>
      %65 = arith.addf %49, %64 : vector<8x128xf32>
      %66 = vector.extract_strided_slice %65 {offsets = [0, 0], sizes = [2, 128], strides = [1, 1]} : vector<8x128xf32> to vector<2x128xf32>
      %c3_i32 = arith.constant 3 : i32
      %67 = arith.addi %16, %c3_i32 : i32
      %68 = arith.index_cast %67 : i32 to index
      %c0_23 = arith.constant 0 : index
      %69 = vector.load %arg3[%68, %c0_23] : memref<64x128xf32, #tpu.memory_space<vmem>>, vector<1x128xf32>
      %70 = arith.mulf %65, %3 : vector<8x128xf32>
      %c1_i32_24 = arith.constant 1 : i32
      %71 = tpu.dynamic_rotate %70 by %c1_i32_24 dim 0 : vector<8x128xf32>, i32 -> vector<8x128xf32>
      %72 = arith.addf %70, %71 : vector<8x128xf32>
      %73 = vector.broadcast %69 : vector<1x128xf32> to vector<8x128xf32>
      %74 = arith.addf %72, %73 : vector<8x128xf32>
      %75 = math.tanh %74 : vector<8x128xf32>
      %76 = arith.mulf %75, %4 : vector<8x128xf32>
      %cst_25 = arith.constant dense<0.000000e+00> : vector<8xf32>
      %77 = vector.multi_reduction <add>, %76, %cst_25 [1] : vector<8x128xf32> to vector<8xf32>
      %78 = vector.shape_cast %77 : vector<8xf32> to vector<8x1xf32>
      %79 = vector.shape_cast %78 : vector<8x1xf32> to vector<8x1xf32>
      %80 = vector.broadcast %79 : vector<8x1xf32> to vector<8x128xf32>
      %81 = arith.addf %65, %80 : vector<8x128xf32>
      %82 = vector.extract_strided_slice %81 {offsets = [0, 0], sizes = [2, 128], strides = [1, 1]} : vector<8x128xf32> to vector<2x128xf32>
      %c4_i32 = arith.constant 4 : i32
      %83 = arith.addi %16, %c4_i32 : i32
      %84 = arith.index_cast %83 : i32 to index
      %c0_26 = arith.constant 0 : index
      %85 = vector.load %arg3[%84, %c0_26] : memref<64x128xf32, #tpu.memory_space<vmem>>, vector<1x128xf32>
      %86 = arith.mulf %81, %3 : vector<8x128xf32>
      %c1_i32_27 = arith.constant 1 : i32
      %87 = tpu.dynamic_rotate %86 by %c1_i32_27 dim 0 : vector<8x128xf32>, i32 -> vector<8x128xf32>
      %88 = arith.addf %86, %87 : vector<8x128xf32>
      %89 = vector.broadcast %85 : vector<1x128xf32> to vector<8x128xf32>
      %90 = arith.addf %88, %89 : vector<8x128xf32>
      %91 = math.tanh %90 : vector<8x128xf32>
      %92 = arith.mulf %91, %4 : vector<8x128xf32>
      %cst_28 = arith.constant dense<0.000000e+00> : vector<8xf32>
      %93 = vector.multi_reduction <add>, %92, %cst_28 [1] : vector<8x128xf32> to vector<8xf32>
      %94 = vector.shape_cast %93 : vector<8xf32> to vector<8x1xf32>
      %95 = vector.shape_cast %94 : vector<8x1xf32> to vector<8x1xf32>
      %96 = vector.broadcast %95 : vector<8x1xf32> to vector<8x128xf32>
      %97 = arith.addf %81, %96 : vector<8x128xf32>
      %98 = vector.extract_strided_slice %97 {offsets = [0, 0], sizes = [2, 128], strides = [1, 1]} : vector<8x128xf32> to vector<2x128xf32>
      %c5_i32 = arith.constant 5 : i32
      %99 = arith.addi %16, %c5_i32 : i32
      %100 = arith.index_cast %99 : i32 to index
      %c0_29 = arith.constant 0 : index
      %101 = vector.load %arg3[%100, %c0_29] : memref<64x128xf32, #tpu.memory_space<vmem>>, vector<1x128xf32>
      %102 = arith.mulf %97, %3 : vector<8x128xf32>
      %c1_i32_30 = arith.constant 1 : i32
      %103 = tpu.dynamic_rotate %102 by %c1_i32_30 dim 0 : vector<8x128xf32>, i32 -> vector<8x128xf32>
      %104 = arith.addf %102, %103 : vector<8x128xf32>
      %105 = vector.broadcast %101 : vector<1x128xf32> to vector<8x128xf32>
      %106 = arith.addf %104, %105 : vector<8x128xf32>
      %107 = math.tanh %106 : vector<8x128xf32>
      %108 = arith.mulf %107, %4 : vector<8x128xf32>
      %cst_31 = arith.constant dense<0.000000e+00> : vector<8xf32>
      %109 = vector.multi_reduction <add>, %108, %cst_31 [1] : vector<8x128xf32> to vector<8xf32>
      %110 = vector.shape_cast %109 : vector<8xf32> to vector<8x1xf32>
      %111 = vector.shape_cast %110 : vector<8x1xf32> to vector<8x1xf32>
      %112 = vector.broadcast %111 : vector<8x1xf32> to vector<8x128xf32>
      %113 = arith.addf %97, %112 : vector<8x128xf32>
      %114 = vector.extract_strided_slice %113 {offsets = [0, 0], sizes = [2, 128], strides = [1, 1]} : vector<8x128xf32> to vector<2x128xf32>
      %c6_i32 = arith.constant 6 : i32
      %115 = arith.addi %16, %c6_i32 : i32
      %116 = arith.index_cast %115 : i32 to index
      %c0_32 = arith.constant 0 : index
      %117 = vector.load %arg3[%116, %c0_32] : memref<64x128xf32, #tpu.memory_space<vmem>>, vector<1x128xf32>
      %118 = arith.mulf %113, %3 : vector<8x128xf32>
      %c1_i32_33 = arith.constant 1 : i32
      %119 = tpu.dynamic_rotate %118 by %c1_i32_33 dim 0 : vector<8x128xf32>, i32 -> vector<8x128xf32>
      %120 = arith.addf %118, %119 : vector<8x128xf32>
      %121 = vector.broadcast %117 : vector<1x128xf32> to vector<8x128xf32>
      %122 = arith.addf %120, %121 : vector<8x128xf32>
      %123 = math.tanh %122 : vector<8x128xf32>
      %124 = arith.mulf %123, %4 : vector<8x128xf32>
      %cst_34 = arith.constant dense<0.000000e+00> : vector<8xf32>
      %125 = vector.multi_reduction <add>, %124, %cst_34 [1] : vector<8x128xf32> to vector<8xf32>
      %126 = vector.shape_cast %125 : vector<8xf32> to vector<8x1xf32>
      %127 = vector.shape_cast %126 : vector<8x1xf32> to vector<8x1xf32>
      %128 = vector.broadcast %127 : vector<8x1xf32> to vector<8x128xf32>
      %129 = arith.addf %113, %128 : vector<8x128xf32>
      %130 = vector.extract_strided_slice %129 {offsets = [0, 0], sizes = [2, 128], strides = [1, 1]} : vector<8x128xf32> to vector<2x128xf32>
      %c7_i32 = arith.constant 7 : i32
      %131 = arith.addi %16, %c7_i32 : i32
      %132 = arith.index_cast %131 : i32 to index
      %c0_35 = arith.constant 0 : index
      %133 = vector.load %arg3[%132, %c0_35] : memref<64x128xf32, #tpu.memory_space<vmem>>, vector<1x128xf32>
      %134 = arith.mulf %129, %3 : vector<8x128xf32>
      %c1_i32_36 = arith.constant 1 : i32
      %135 = tpu.dynamic_rotate %134 by %c1_i32_36 dim 0 : vector<8x128xf32>, i32 -> vector<8x128xf32>
      %136 = arith.addf %134, %135 : vector<8x128xf32>
      %137 = vector.broadcast %133 : vector<1x128xf32> to vector<8x128xf32>
      %138 = arith.addf %136, %137 : vector<8x128xf32>
      %139 = math.tanh %138 : vector<8x128xf32>
      %140 = arith.mulf %139, %4 : vector<8x128xf32>
      %cst_37 = arith.constant dense<0.000000e+00> : vector<8xf32>
      %141 = vector.multi_reduction <add>, %140, %cst_37 [1] : vector<8x128xf32> to vector<8xf32>
      %142 = vector.shape_cast %141 : vector<8xf32> to vector<8x1xf32>
      %143 = vector.shape_cast %142 : vector<8x1xf32> to vector<8x1xf32>
      %144 = vector.broadcast %143 : vector<8x1xf32> to vector<8x128xf32>
      %145 = arith.addf %129, %144 : vector<8x128xf32>
      %146 = vector.extract_strided_slice %145 {offsets = [0, 0], sizes = [2, 128], strides = [1, 1]} : vector<8x128xf32> to vector<2x128xf32>
      %147 = tpu.concatenate %34, %50, %66, %82, %98, %114, %130, %146 in 0 : vector<2x128xf32>, vector<2x128xf32>, vector<2x128xf32>, vector<2x128xf32>, vector<2x128xf32>, vector<2x128xf32>, vector<2x128xf32>, vector<2x128xf32> -> vector<16x128xf32>
      %148 = arith.index_cast %18 : i32 to index
      %c0_38 = arith.constant 0 : index
      %149 = vector.load %arg6[%148, %c0_38] : memref<128x128xf32, #tpu.memory_space<vmem>>, vector<16x128xf32>
      tpu.vector_store %arg6[%148, %c0_38], %147 {strides = array<i32>} : memref<128x128xf32, #tpu.memory_space<vmem>>, vector<16x128xf32>,
      scf.yield %145 : vector<8x128xf32>
    }
    %c0_10 = arith.constant 0 : index
    %c0_11 = arith.constant 0 : index
    %14 = vector.load %arg7[%c0_10, %c0_11] : memref<8x128xf32, #tpu.memory_space<vmem>>, vector<8x128xf32>
    tpu.vector_store %arg7[%c0_10, %c0_11], %13 {strides = array<i32>} : memref<8x128xf32, #tpu.memory_space<vmem>>, vector<8x128xf32>,
    return
  }
  func.func @transform_0(%arg0: i32, %arg1: memref<1xi32, #tpu.memory_space<smem>>) -> (i32, i32) {
    %c0_i32 = arith.constant 0 : i32
    %c0_i32_0 = arith.constant 0 : i32
    %c0_i32_1 = arith.constant 0 : i32
    return %c0_i32, %c0_i32_0 : i32, i32
  }
  func.func @transform_1(%arg0: i32, %arg1: memref<1xi32, #tpu.memory_space<smem>>) -> (i32, i32) {
    %c0_i32 = arith.constant 0 : i32
    %c0_i32_0 = arith.constant 0 : i32
    return %arg0, %c0_i32 : i32, i32
  }
  func.func @transform_2(%arg0: i32, %arg1: memref<1xi32, #tpu.memory_space<smem>>) -> (i32, i32) {
    %c0_i32 = arith.constant 0 : i32
    %c0_i32_0 = arith.constant 0 : i32
    %c0_i32_1 = arith.constant 0 : i32
    return %c0_i32, %c0_i32_0 : i32, i32
  }
  func.func @transform_3(%arg0: i32, %arg1: memref<1xi32, #tpu.memory_space<smem>>) -> (i32, i32) {
    %c0_i32 = arith.constant 0 : i32
    %c0_i32_0 = arith.constant 0 : i32
    %c0_i32_1 = arith.constant 0 : i32
    return %c0_i32, %c0_i32_0 : i32, i32
  }
  func.func @transform_4(%arg0: i32, %arg1: memref<1xi32, #tpu.memory_space<smem>>) -> (i32, i32) {
    %c0_i32 = arith.constant 0 : i32
    %c0_i32_0 = arith.constant 0 : i32
    return %arg0, %c0_i32 : i32, i32
  }
}

</mosaic_0001>

<llo_original>
// kernel: tpu_custom_call.1
$region0: #{tpu_custom_call.1}
  #allocation0 [shape = 'u32[]', space=smem, size = 0x4, offset = 0x4, fixed_abs, tag = 'smem constant byte address 0x4 - core index']
  #allocation1 [shape = 'u32[72,128]{1,0:T(1,128)}', space=vmem, size = 0x9000, scoped, tag = 'internal scratch']
  #allocation2 [shape = 'f32[8,128]{1,0:T(8,128)}', space=vmem, size = 0x1000, scoped, tag = 'scratch operand']
  #allocation3 [shape = 's32[1]{0}', space=sflag, size = 0x4, scoped, tag = 'scoped memory for tpu_custom_call.1']
  #allocation4 [shape = 's32[1]{0:T(128)S(6)}', space=smem, size = 0x200, scoped, tag = 'prefetched SMEM operand 0']
  %s0 = inlined_call_operand.<no memory space> [shape: s32[1], index: 0, kind: input, shape index: {}]
  %s1 = inlined_call_operand.hbm [shape: f32[8,128], index: 1, kind: input, shape index: {}]
  %s2 = inlined_call_operand.hbm [shape: f32[64,128], index: 2, kind: input, shape index: {}]
  %s3 = inlined_call_operand.hbm [shape: f32[8,128], index: 3, kind: input, shape index: {}]
  %s4 = inlined_call_operand.hbm [shape: f32[8,128], index: 4, kind: input, shape index: {}]
  %s5 = inlined_call_operand.hbm [shape: f32[128,128], index: 5, kind: output, shape index: {}]
  %s6 = sld [smem:[#allocation0]]
  $region53: #{tpu_custom_call.1} parent=0
    _
  %s8 = ssub.s32 1, %s6
  %s9 = scalar_select 0, %s8, %s6
  %10 = sst [smem:[#allocation4]] %s0
  $region1: #{tpu_custom_call.1} parent=0
    #allocation5 [shape = 'u8[4096]{0}', space=vmem, size = 0x1000, scoped, tag = 'input window, operand 1, single buffered']
    #allocation6 [shape = 's32[1]{0}', space=sflag, size = 0x4, scoped, tag = 'scoped memory for tpu_custom_call.1']
    #allocation7 [shape = 's32[1]{0}', space=sflag, size = 0x4, scoped, tag = 'scoped memory for tpu_custom_call.1']
    #allocation8 [shape = 'u8[32768]{0}', space=vmem, size = 0x8000, scoped, tag = 'input window, operand 2, single buffered']
    #allocation9 [shape = 's32[1]{0}', space=sflag, size = 0x4, scoped, tag = 'scoped memory for tpu_custom_call.1']
    #allocation10 [shape = 'u8[4096]{0}', space=vmem, size = 0x1000, scoped, tag = 'input window, operand 3, single buffered']
    #allocation11 [shape = 'u8[4096]{0}', space=vmem, size = 0x1000, scoped, tag = 'input window, operand 4, single buffered']
    #allocation12 [shape = 's32[1]{0}', space=sflag, size = 0x4, scoped, tag = 'scoped memory for tpu_custom_call.1']
    #allocation13 [shape = 'u8[65536]{0}', space=vmem, size = 0x10000, scoped, tag = 'output window, operand 0, single buffered']
    %11 = vsyncpa [#allocation6], 0
    %12 = vsyncpa [#allocation9], 0
    %13 = vsyncpa [#allocation12], 0
    %14 = vsyncpa [#allocation7], 0
    // Predicated region
    $region2: #{tpu_custom_call.1} parent=1 // pred_check
      _
    $region3: #{tpu_custom_call.1} parent=1 // pred_check_branch
      %16 = sbr.rel (0) target = $region5
    $region4: #{tpu_custom_call.1} parent=1 // pred_region
      %18 = vsyncadd [#allocation6], 0
      %s20 = sshll.u32 %s1, 4
      %s21 = int_to_ptr.hbm [resolvable:$true] %s20
      %s22 = sshll.u32 [#allocation5], 4
      %s23 = int_to_ptr.vmem [resolvable:$true] %s22
      %25 = dma.hbm_to_vmem [thread:$0]  %s21, 128, %s23, [#allocation6]
    $region5: #{tpu_custom_call.1} parent=1 // pred_fallthru
      _
    // Predicated region
    $region6: #{tpu_custom_call.1} parent=1 // pred_check
      _
    $region7: #{tpu_custom_call.1} parent=1 // pred_check_branch
      %27 = sbr.rel (0) target = $region9
    $region8: #{tpu_custom_call.1} parent=1 // pred_region
      %29 = vsyncadd [#allocation9], 0
      %s30 = sshll.u32 %s2, 4
      %s31 = int_to_ptr.hbm [resolvable:$true] %s30
      %s32 = sshll.u32 [#allocation8], 4
      %s33 = int_to_ptr.vmem [resolvable:$true] %s32
      %38 = dma.hbm_to_vmem [thread:$0]  %s31, 1024, %s33, [#allocation9], 128, 128, 8
    $region9: #{tpu_custom_call.1} parent=1 // pred_fallthru
      _
    // Predicated region
    $region10: #{tpu_custom_call.1} parent=1 // pred_check
      _
    $region11: #{tpu_custom_call.1} parent=1 // pred_check_branch
      %40 = sbr.rel (0) target = $region13
    $region12: #{tpu_custom_call.1} parent=1 // pred_region
      %42 = vsyncadd [#allocation9], 0
      %s44 = sshll.u32 %s3, 4
      %s45 = int_to_ptr.hbm [resolvable:$true] %s44
      %s46 = sshll.u32 [#allocation10], 4
      %s47 = int_to_ptr.vmem [resolvable:$true] %s46
      %49 = dma.hbm_to_vmem [thread:$0]  %s45, 128, %s47, [#allocation9]
    $region13: #{tpu_custom_call.1} parent=1 // pred_fallthru
      _
    // Predicated region
    $region14: #{tpu_custom_call.1} parent=1 // pred_check
      _
    $region15: #{tpu_custom_call.1} parent=1 // pred_check_branch
      %51 = sbr.rel (0) target = $region17
    $region16: #{tpu_custom_call.1} parent=1 // pred_region
      %53 = vsyncadd [#allocation12], 0
      %s55 = sshll.u32 %s4, 4
      %s56 = int_to_ptr.hbm [resolvable:$true] %s55
      %s57 = sshll.u32 [#allocation11], 4
      %s58 = int_to_ptr.vmem [resolvable:$true] %s57
      %60 = dma.hbm_to_vmem [thread:$0]  %s56, 128, %s58, [#allocation12]
    $region17: #{tpu_custom_call.1} parent=1 // pred_fallthru
      _
    // Predicated region
    $region18: #{tpu_custom_call.1} parent=1 // pred_check
      _
    $region19: #{tpu_custom_call.1} parent=1 // pred_check_branch
      %62 = sbr.rel (0) target = $region21
    $region20: #{tpu_custom_call.1} parent=1 // pred_region
      %64 = dma.done [#allocation6], 128
    $region21: #{tpu_custom_call.1} parent=1 // pred_fallthru
      _
    // Predicated region
    $region22: #{tpu_custom_call.1} parent=1 // pred_check
      _
    $region23: #{tpu_custom_call.1} parent=1 // pred_check_branch
      %66 = sbr.rel (0) target = $region25
    $region24: #{tpu_custom_call.1} parent=1 // pred_region
      %68 = dma.done [#allocation9], 1024
    $region25: #{tpu_custom_call.1} parent=1 // pred_fallthru
      _
    // Predicated region
    $region26: #{tpu_custom_call.1} parent=1 // pred_check
      _
    $region27: #{tpu_custom_call.1} parent=1 // pred_check_branch
      %70 = sbr.rel (0) target = $region29
    $region28: #{tpu_custom_call.1} parent=1 // pred_region
      %72 = dma.done [#allocation9], 128
    $region29: #{tpu_custom_call.1} parent=1 // pred_fallthru
      _
    // Predicated region
    $region30: #{tpu_custom_call.1} parent=1 // pred_check
      _
    $region31: #{tpu_custom_call.1} parent=1 // pred_check_branch
      %74 = sbr.rel (0) target = $region33
    $region32: #{tpu_custom_call.1} parent=1 // pred_region
      %76 = dma.done [#allocation12], 128
    $region33: #{tpu_custom_call.1} parent=1 // pred_fallthru
      _
    %p77 = scmp.eq.s32.totalorder 0, 0
    // Predicated region
    $region34: #{tpu_custom_call.1} parent=1 // pred_check
      %p78 = pneg %p77
    $region35: #{tpu_custom_call.1} parent=1 // pred_check_branch
      %80 = sbr.rel (%p78) target = $region37
    $region36: #{tpu_custom_call.1} parent=1 // pred_region
      %v81 = vld [vmem:[#allocation5] sm:$0xff]
      %82 = vst [vmem:[#allocation2] sm:$0xff] %v81
    $region37: #{tpu_custom_call.1} parent=1 // pred_fallthru
      _
    %v83 = vld [vmem:[#allocation10] sm:$0xff]
    %v84 = vld [vmem:[#allocation11] sm:$0xff]
    %v85 = vld [vmem:[#allocation2] sm:$0xff]
    %s86 = smul.u32 0, 8
    %s87 = sld [smem:[#allocation4]]
    %s88 = ssub.s32 %s87, %s86
    %p89 = scmp.lt.s32.totalorder %s88, 8
    %s90 = scalar_select %p89, %s88, 8
    %p91 = scmp.gt.s32.totalorder %s90, 0
    %s92 = scalar_select %p91, %s90, 0
    // While loop
    $region38: #{tpu_custom_call.1} parent=1 // loop_pre_header
      _
    $region39: #{tpu_custom_call.1} parent=1 // loop_header
      %s94 = sphi 0, %s96
      %p95 = scmp.ge.s32.totalorder %s94, %s92
      %v99 = vphi %v85, %v204
    $region40: #{tpu_custom_call.1} parent=1 // loop_header_branch
      %98 = sbr.rel (%p95) target = $region44
    $region41: #{tpu_custom_call.1} parent=1 // loop_body
      %s100 = smul.u32 %s94, 8
      %s101 = smul.u32 %s94, 16
      %s102 = scalar_lea.vmem [#allocation8], %s100
      %v103 = vld [vmem:[%s102] sm:$0x1]
      %v104 = vmul.f32 %v99, %v83
      %v105 = vrot.slane %v104, 7
      %v106 = vadd.f32 %v104, %v105
      %v107 = vperm.slane %v103, 0
      %v108 = vadd.f32 %v106, %v107
      %v109 = vtanh.pop %v108
      %v110 = vmul.f32 %v109, %v84
      %111 = vadd.xlane.f32.xlu0 %v110
      %v112 = vpop.xlane.xlu0 %111
      %v113 = vadd.f32 %v99, %v112
      %s114 = sadd.s32 %s100, 1
      %s115 = scalar_lea.vmem [#allocation8], %s114
      %v116 = vld [vmem:[%s115] sm:$0x1]
      %v117 = vmul.f32 %v113, %v83
      %v118 = vrot.slane %v117, 7
      %v119 = vadd.f32 %v117, %v118
      %v120 = vperm.slane %v116, 0
      %v121 = vadd.f32 %v119, %v120
      %v122 = vtanh.pop %v121
      %v123 = vmul.f32 %v122, %v84
      %124 = vadd.xlane.f32.xlu0 %v123
      %v125 = vpop.xlane.xlu0 %124
      %v126 = vadd.f32 %v113, %v125
      %s127 = sadd.s32 %s100, 2
      %s128 = scalar_lea.vmem [#allocation8], %s127
      %v129 = vld [vmem:[%s128] sm:$0x1]
      %v130 = vmul.f32 %v126, %v83
      %v131 = vrot.slane %v130, 7
      %v132 = vadd.f32 %v130, %v131
      %v133 = vperm.slane %v129, 0
      %v134 = vadd.f32 %v132, %v133
      %v135 = vtanh.pop %v134
      %v136 = vmul.f32 %v135, %v84
      %137 = vadd.xlane.f32.xlu0 %v136
      %v138 = vpop.xlane.xlu0 %137
      %v139 = vadd.f32 %v126, %v138
      %s140 = sadd.s32 %s100, 3
      %s141 = scalar_lea.vmem [#allocation8], %s140
      %v142 = vld [vmem:[%s141] sm:$0x1]
      %v143 = vmul.f32 %v139, %v83
      %v144 = vrot.slane %v143, 7
      %v145 = vadd.f32 %v143, %v144
      %v146 = vperm.slane %v142, 0
      %v147 = vadd.f32 %v145, %v146
      %v148 = vtanh.pop %v147
      %v149 = vmul.f32 %v148, %v84
      %150 = vadd.xlane.f32.xlu0 %v149
      %v151 = vpop.xlane.xlu0 %150
      %v152 = vadd.f32 %v139, %v151
      %s153 = sadd.s32 %s100, 4
      %s154 = scalar_lea.vmem [#allocation8], %s153
      %v155 = vld [vmem:[%s154] sm:$0x1]
      %v156 = vmul.f32 %v152, %v83
      %v157 = vrot.slane %v156, 7
      %v158 = vadd.f32 %v156, %v157
      %v159 = vperm.slane %v155, 0
      %v160 = vadd.f32 %v158, %v159
      %v161 = vtanh.pop %v160
      %v162 = vmul.f32 %v161, %v84
      %163 = vadd.xlane.f32.xlu0 %v162
      %v164 = vpop.xlane.xlu0 %163
      %v165 = vadd.f32 %v152, %v164
      %s166 = sadd.s32 %s100, 5
      %s167 = scalar_lea.vmem [#allocation8], %s166
      %v168 = vld [vmem:[%s167] sm:$0x1]
      %v169 = vmul.f32 %v165, %v83
      %v170 = vrot.slane %v169, 7
      %v171 = vadd.f32 %v169, %v170
      %v172 = vperm.slane %v168, 0
      %v173 = vadd.f32 %v171, %v172
      %v174 = vtanh.pop %v173
      %v175 = vmul.f32 %v174, %v84
      %176 = vadd.xlane.f32.xlu0 %v175
      %v177 = vpop.xlane.xlu0 %176
      %v178 = vadd.f32 %v165, %v177
      %s179 = sadd.s32 %s100, 6
      %s180 = scalar_lea.vmem [#allocation8], %s179
      %v181 = vld [vmem:[%s180] sm:$0x1]
      %v182 = vmul.f32 %v178, %v83
      %v183 = vrot.slane %v182, 7
      %v184 = vadd.f32 %v182, %v183
      %v185 = vperm.slane %v181, 0
      %v186 = vadd.f32 %v184, %v185
      %v187 = vtanh.pop %v186
      %v188 = vmul.f32 %v187, %v84
      %189 = vadd.xlane.f32.xlu0 %v188
      %v190 = vpop.xlane.xlu0 %189
      %v191 = vadd.f32 %v178, %v190
      %s192 = sadd.s32 %s100, 7
      %s193 = scalar_lea.vmem [#allocation8], %s192
      %v194 = vld [vmem:[%s193] sm:$0x1]
      %v195 = vmul.f32 %v191, %v83
      %v196 = vrot.slane %v195, 7
      %v197 = vadd.f32 %v195, %v196
      %v198 = vperm.slane %v194, 0
      %v199 = vadd.f32 %v197, %v198
      %v200 = vtanh.pop %v199
      %v201 = vmul.f32 %v200, %v84
      %202 = vadd.xlane.f32.xlu0 %v201
      %v203 = vpop.xlane.xlu0 %202
      %v204 = vadd.f32 %v191, %v203
      %v206 = vrot.slane %v126, 6
      %v209 = vrot.slane %v139, 4
      %v212 = vrot.slane %v152, 2
      %v215 = vrot.slane %v178, 6
      %v218 = vrot.slane %v191, 4
      %v221 = vrot.slane %v204, 2
      %vm223 = vcmask 1041408
      %v224 = vsel %vm223, %v113, %v206
      %vm225 = vcmask 1043456
      %v226 = vsel %vm225, %v224, %v209
      %vm227 = vcmask 1045504
      %v228 = vsel %vm227, %v226, %v212
      %v229 = vsel %vm223, %v165, %v215
      %v230 = vsel %vm225, %v229, %v218
      %v231 = vsel %vm227, %v230, %v221
      %s232 = scalar_lea.vmem [#allocation13], %s101
      %233 = vst [vmem:[%s232] sm:$0xff] %v228
      %234 = vst [vmem:[%s232 + $0x8] sm:$0xff] %v231
    $region42: #{tpu_custom_call.1} parent=1 // loop_footer
      %s96 = sadd.s32 %s94, 1
    $region43: #{tpu_custom_call.1} parent=1 // loop_footer_branch
      %93 = sbr.rel target = $region39
    $region44: #{tpu_custom_call.1} parent=1 // loop_exit
      _
    %235 = vst [vmem:[#allocation2] sm:$0xff] %v99
    // Predicated region
    $region45: #{tpu_custom_call.1} parent=1 // pred_check
      _
    $region46: #{tpu_custom_call.1} parent=1 // pred_check_branch
      %237 = sbr.rel (0) target = $region48
    $region47: #{tpu_custom_call.1} parent=1 // pred_region
      %239 = vsyncadd [#allocation7], 0
      %s240 = sshll.u32 [#allocation13], 4
      %s241 = int_to_ptr.vmem [resolvable:$true] %s240
      %s242 = sshll.u32 %s5, 4
      %s243 = int_to_ptr.hbm [resolvable:$true] %s242
      %248 = dma.vmem_to_hbm [thread:$0]  %s241, 2048, %s243, [#allocation7], 128, 128, 8
    $region48: #{tpu_custom_call.1} parent=1 // pred_fallthru
      _
    // Predicated region
    $region49: #{tpu_custom_call.1} parent=1 // pred_check
      _
    $region50: #{tpu_custom_call.1} parent=1 // pred_check_branch
      %250 = sbr.rel (0) target = $region52
    $region51: #{tpu_custom_call.1} parent=1 // pred_region
      %252 = dma.done [#allocation7], 2048
    $region52: #{tpu_custom_call.1} parent=1 // pred_fallthru
      _
    %253 = vsyncpa [#allocation6], 1
    %254 = vsyncpa [#allocation9], 1
    %255 = vsyncpa [#allocation12], 1
    %256 = vsyncpa [#allocation7], 1

</llo_original>
